<compile_context>
chip_gen: v7x
topology: tpu7x:2x2x1
jax: 0.10.0
libtpu: 0.0.40
codegen_flags: <defaults>
</compile_context>

<pallas_src>
import functools

import jax
import jax.numpy as jnp
from jax import lax
from jax.experimental import pallas as pl
from jax.experimental.pallas import tpu as pltpu

LN_EPS = 1e-5  # PyTorch nn.LayerNorm default


def _layernorm(x, gamma, beta):
    mu = jnp.mean(x, axis=-1, keepdims=True)
    var = jnp.mean((x - mu) ** 2, axis=-1, keepdims=True)
    return (x - mu) * lax.rsqrt(var + LN_EPS) * gamma + beta


# "A @ B^T" contraction (both operands row-major, contract last dims).
NT_DIMS = (((1,), (1,)), ((), ()))


def transformer_block_kernel(
    x_ref,           # (R, C)   R = batch_per_step * T flattened rows
    wqkv_ref,        # (C, 3C)  [wq*C**-0.5 | wk | wv]
    wp_ref,          # (C, C)   attention output projection
    w1_ref,          # (C, 4C)  ffn up
    w2_ref,          # (4C, C)  ffn down
    vecs_ref,        # (8, C)   rows: g1, be1, g2, be2, bp, b2, pad, pad
    b1_ref,          # (1, 4C)  ffn up bias
    kv_ind_ref,      # (W, C)   stacked-heads block-diagonal indicator
    negmask_ref,     # (R, W)   additive causal/same-batch mask (0 / -inf)
    same_head_ref,   # (W, W)   same-head indicator (per-head row-sum broadcast)
    o_ref,           # (R, C)
    *, num_heads: int,
):
    x = x_ref[...]                   # (R, C)
    R, C = x.shape
    NH = num_heads

    vecs = vecs_ref[...]
    g1, be1, g2, be2, bp, b2 = (vecs[i] for i in range(6))

    # ---- LayerNorm 1 ----
    xn = _layernorm(x, g1, be1)

    # ---- fused multi-head causal self-attention ----
    # One wide QKV matmul (scale already folded into the q columns host-side).
    qkv = jnp.dot(xn, wqkv_ref[...], preferred_element_type=jnp.float32)  # (R, 3C)
    q = qkv[:, :C]
    k = qkv[:, C:2 * C]
    v = qkv[:, 2 * C:]

    # Stack keys/values for all heads; one block-diag indicator serves both:
    # rows of the stack belong to head (row // R), columns to head (col // hs).
    kv_ind = kv_ind_ref[...]                               # (W, C)
    k_tall = jnp.tile(k, (NH, 1)) * kv_ind                 # (W, C)
    v_tall = jnp.tile(v, (NH, 1)) * kv_ind                 # (W, C)

    # Scores for ALL heads in one MXU push: s[:, h*R:(h+1)*R] = q_h @ k_h^T.
    s = lax.dot_general(q, k_tall, NT_DIMS,
                        preferred_element_type=jnp.float32)  # (R, W)
    s = s + negmask_ref[...]                                 # causal + same-batch

    # Fused softmax across heads: one row-wide max, one exp; per-head row sums
    # broadcast back over each head block with one indicator matmul (MXU slot).
    m = jnp.max(s, axis=-1, keepdims=True)                   # (R, 1)
    p = jnp.exp(s - m)                                       # masked -> 0
    denom = jnp.dot(p, same_head_ref[...],
                    preferred_element_type=jnp.float32)      # (R, W)
    p = p * pl.reciprocal(denom, approx=True)                # EUP, not VPU divide

    # Attention values for all heads in one matmul; block-diagonal V places each
    # head's output directly into its column slice (no concatenate needed).
    att = jnp.dot(p, v_tall, preferred_element_type=jnp.float32)          # (R, C)
    att = jnp.dot(att, wp_ref[...], preferred_element_type=jnp.float32) + bp
    x1 = x + att                                                           # residual 1

    # ---- LayerNorm 2 + FeedForward ----
    xn2 = _layernorm(x1, g2, be2)
    h = jnp.dot(xn2, w1_ref[...], preferred_element_type=jnp.float32) + b1_ref[0]
    h = jnp.maximum(h, 0.0)                                                # ReLU
    ff = jnp.dot(h, w2_ref[...], preferred_element_type=jnp.float32) + b2
    # dropout p=0.0 -> identity

    o_ref[...] = (x1 + ff).astype(o_ref.dtype)


def transformer_block(x, params, *, num_heads: int, batch_per_step=None):
    """x: (B, T, C). Weights stored as (in_features, out_features)."""
    B, T, C = x.shape
    H = 4 * C
    NH = num_heads
    hs = C // NH

    # One grid step by default (weights stay resident, no per-step overhead).
    # On v7x (2 TensorCores) with large B, pass batch_per_step=B//2 so the
    # "parallel" grid axis keeps both cores busy.
    BB = B if batch_per_step is None else batch_per_step
    assert B % BB == 0, "batch_per_step must divide B"
    R = BB * T                                              # rows per grid step
    n_steps = B // BB
    assert n_steps == 1 or R % 8 == 0, "(R, C) block must respect (8,128) tiling"
    W = NH * R                                              # stacked-heads score width

    (wq, wk, wv, wp, bp, g1, be1, g2, be2, w1, b1, w2, b2) = params
    f32 = jnp.float32

    # ---- host-side parameter packing ----
    # NOTE: reference scales scores by C**-0.5 (embedding dim), folded into wq.
    scale = jnp.asarray(C, f32) ** -0.5
    wqkv = jnp.concatenate([wq * scale, wk, wv], axis=1).astype(f32)      # (C, 3C)
    vecs = jnp.concatenate(
        [g1, be1, g2, be2, bp, b2, jnp.zeros((2, C), f32)], axis=0
    ).astype(f32)                                                         # (8, C)

    # ---- grid-invariant masks, built once on the host ----
    col_head = jnp.arange(W, dtype=jnp.int32) // R
    kv_ind = (col_head[:, None]
              == (jnp.arange(C, dtype=jnp.int32)[None, :] // hs)).astype(f32)   # (W, C)
    same_head = (col_head[:, None] == col_head[None, :]).astype(f32)             # (W, W)
    qi = jnp.arange(R, dtype=jnp.int32)[:, None]
    kj = jnp.arange(W, dtype=jnp.int32)[None, :] % R
    keep = ((qi // T) == (kj // T)) & ((qi % T) >= (kj % T))
    negmask = jnp.where(keep, 0.0, -jnp.inf).astype(f32)                          # (R, W)

    xf = x.reshape(B * T, C)                                # flatten batch into rows

    const = lambda shape: pl.BlockSpec(shape, lambda i: (0, 0))

    # Rough VMEM budget (weights + activations + masks), generous headroom,
    # floored at 32 MiB (above v5e's 16 MiB default scoped limit).
    est_bytes = 4 * (2 * R * C + 3 * C * C + C * C + 2 * C * H + 8 * C + H
                     + W * C + R * W + W * W + R * H)
    vmem_limit = int(max(32 << 20, min(3 * est_bytes, 48 << 20)))

    out = pl.pallas_call(
        functools.partial(transformer_block_kernel, num_heads=NH),
        out_shape=jax.ShapeDtypeStruct((B * T, C), x.dtype),
        grid_spec=pltpu.PrefetchScalarGridSpec(
            num_scalar_prefetch=0,
            grid=(n_steps,),
            in_specs=[
                pl.BlockSpec((R, C), lambda i: (i, 0)),     # x rows
                const((C, 3 * C)),                          # fused qkv weight
                const((C, C)),                              # projection weight
                const((C, H)),                              # ffn w1
                const((H, C)),                              # ffn w2
                const((8, C)),                              # packed (1,C) vectors
                const((1, H)),                              # ffn b1
                const((W, C)),                              # head block-diag indicator
                const((R, W)),                              # causal/batch additive mask
                const((W, W)),                              # same-head sum indicator
            ],
            out_specs=pl.BlockSpec((R, C), lambda i: (i, 0)),
        ),
        compiler_params=pltpu.CompilerParams(
            dimension_semantics=("parallel",),
            vmem_limit_bytes=vmem_limit,
        ),
    )(xf, wqkv, wp, w1, w2, vecs, b1, kv_ind, negmask, same_head)
    return out.reshape(B, T, C)


# ------------------------- pure-JAX reference -------------------------------
def reference(x, params, *, num_heads: int):
    (wq, wk, wv, wp, bp, g1, be1, g2, be2, w1, b1, w2, b2) = params
    B, T, C = x.shape
    hs = C // num_heads

    def ln(v, g, b):
        mu = v.mean(-1, keepdims=True)
        var = ((v - mu) ** 2).mean(-1, keepdims=True)
        return (v - mu) / jnp.sqrt(var + LN_EPS) * g + b

    xn = ln(x, g1[0], be1[0])
    q = xn @ wq
    k = xn @ wk
    v = xn @ wv
    scale = C ** -0.5
    mask = jnp.tril(jnp.ones((T, T), bool))
    outs = []
    for h in range(num_heads):
        sl = slice(h * hs, (h + 1) * hs)
        w = jnp.einsum("btd,bsd->bts", q[..., sl], k[..., sl]) * scale
        w = jnp.where(mask, w, -jnp.inf)
        w = jax.nn.softmax(w, axis=-1)
        outs.append(jnp.einsum("bts,bsd->btd", w, v[..., sl]))
    attn = jnp.concatenate(outs, -1) @ wp + bp[0]
    x1 = x + attn
    xn2 = ln(x1, g2[0], be2[0])
    ff = jnp.maximum(xn2 @ w1 + b1[0], 0.0) @ w2 + b2[0]
    return x1 + ff


# ----------------------------------------------------------------------------
if __name__ == "__main__":
    B, T, C, NH = 2, 8, 32, 4     # block_size == T == 8, num_embeddings=32, 4 heads
    H = 4 * C

    key = jax.random.PRNGKey(0)
    ks = jax.random.split(key, 16)
    f32 = jnp.float32
    init = lambda k, shape: (0.02 * jax.random.normal(k, shape)).astype(f32)

    x = jax.random.normal(ks[0], (B, T, C), dtype=f32)

    params = (
        init(ks[1], (C, C)),                 # wq  (per-head weights concat on out dim)
        init(ks[2], (C, C)),                 # wk
        init(ks[3], (C, C)),                 # wv
        init(ks[4], (C, C)),                 # wp  projection weight
        init(ks[5], (1, C)),                 # bp  projection bias
        jnp.ones((1, C), f32),               # ln1 gamma
        jnp.zeros((1, C), f32),              # ln1 beta
        jnp.ones((1, C), f32),               # ln2 gamma
        jnp.zeros((1, C), f32),              # ln2 beta
        init(ks[6], (C, H)),                 # ffn w1
        init(ks[7], (1, H)),                 # ffn b1
        init(ks[8], (H, C)),                 # ffn w2
        init(ks[9], (1, C)),                 # ffn b2
    )

    out = transformer_block(x, params, num_heads=NH)
    out = jax.block_until_ready(out)

    ref = reference(x, params, num_heads=NH)
    assert out.shape == (B, T, C)
    # Tolerance loosened slightly vs 1e-5: the softmax denominator now uses the
    # EUP approximate reciprocal (pl.reciprocal(..., approx=True)).
    err = float(jnp.max(jnp.abs(out - ref)))
    assert jnp.allclose(out, ref, atol=1e-3, rtol=1e-3), f"mismatch vs reference (max abs err {err})"

    print("KERNEL_OK")
</pallas_src>

<mosaic_0001>
module attributes {stable_mosaic.version = 11 : i64} {
  func.func @transformer_block_kernel(%arg0: i32, %arg1: memref<16x32xf32, #tpu.memory_space<vmem>>, %arg2: memref<32x96xf32, #tpu.memory_space<vmem>>, %arg3: memref<32x32xf32, #tpu.memory_space<vmem>>, %arg4: memref<32x128xf32, #tpu.memory_space<vmem>>, %arg5: memref<128x32xf32, #tpu.memory_space<vmem>>, %arg6: memref<8x32xf32, #tpu.memory_space<vmem>>, %arg7: memref<1x128xf32, #tpu.memory_space<vmem>>, %arg8: memref<64x32xf32, #tpu.memory_space<vmem>>, %arg9: memref<16x64xf32, #tpu.memory_space<vmem>>, %arg10: memref<64x64xf32, #tpu.memory_space<vmem>>, %arg11: memref<16x32xf32, #tpu.memory_space<vmem>>) attributes {dimension_semantics = [#tpu.dimension_semantics<parallel>], iteration_bounds = array<i64: 1>, scalar_prefetch = 0 : i64, scratch_operands = 0 : i64, tpu.core_type = #tpu.core_type<tc>, window_params = [{transform_indices = @transform_0, window_bounds = array<i64: 16, 32>}, {pipeline_mode = #tpu.pipeline_mode<synchronous>, transform_indices = @transform_1, window_bounds = array<i64: 32, 96>}, {pipeline_mode = #tpu.pipeline_mode<synchronous>, transform_indices = @transform_2, window_bounds = array<i64: 32, 32>}, {pipeline_mode = #tpu.pipeline_mode<synchronous>, transform_indices = @transform_3, window_bounds = array<i64: 32, 128>}, {pipeline_mode = #tpu.pipeline_mode<synchronous>, transform_indices = @transform_4, window_bounds = array<i64: 128, 32>}, {pipeline_mode = #tpu.pipeline_mode<synchronous>, transform_indices = @transform_5, window_bounds = array<i64: 8, 32>}, {pipeline_mode = #tpu.pipeline_mode<synchronous>, transform_indices = @transform_6, window_bounds = array<i64: 1, 128>}, {pipeline_mode = #tpu.pipeline_mode<synchronous>, transform_indices = @transform_7, window_bounds = array<i64: 64, 32>}, {pipeline_mode = #tpu.pipeline_mode<synchronous>, transform_indices = @transform_8, window_bounds = array<i64: 16, 64>}, {pipeline_mode = #tpu.pipeline_mode<synchronous>, transform_indices = @transform_9, window_bounds = array<i64: 64, 64>}, {transform_indices = @transform_10, window_bounds = array<i64: 16, 32>}]} {
    %c0 = arith.constant 0 : index
    %c0_0 = arith.constant 0 : index
    %0 = vector.load %arg1[%c0, %c0_0] : memref<16x32xf32, #tpu.memory_space<vmem>>, vector<16x32xf32>
    %c0_1 = arith.constant 0 : index
    %c0_2 = arith.constant 0 : index
    %1 = vector.load %arg6[%c0_1, %c0_2] : memref<8x32xf32, #tpu.memory_space<vmem>>, vector<8x32xf32>
    %2 = vector.extract_strided_slice %1 {offsets = [0, 0], sizes = [1, 32], strides = [1, 1]} : vector<8x32xf32> to vector<1x32xf32>
    %3 = vector.shape_cast %2 : vector<1x32xf32> to vector<32xf32>
    %4 = vector.extract_strided_slice %1 {offsets = [1, 0], sizes = [1, 32], strides = [1, 1]} : vector<8x32xf32> to vector<1x32xf32>
    %5 = vector.shape_cast %4 : vector<1x32xf32> to vector<32xf32>
    %6 = vector.extract_strided_slice %1 {offsets = [2, 0], sizes = [1, 32], strides = [1, 1]} : vector<8x32xf32> to vector<1x32xf32>
    %7 = vector.shape_cast %6 : vector<1x32xf32> to vector<32xf32>
    %8 = vector.extract_strided_slice %1 {offsets = [3, 0], sizes = [1, 32], strides = [1, 1]} : vector<8x32xf32> to vector<1x32xf32>
    %9 = vector.shape_cast %8 : vector<1x32xf32> to vector<32xf32>
    %10 = vector.extract_strided_slice %1 {offsets = [4, 0], sizes = [1, 32], strides = [1, 1]} : vector<8x32xf32> to vector<1x32xf32>
    %11 = vector.shape_cast %10 : vector<1x32xf32> to vector<32xf32>
    %12 = vector.extract_strided_slice %1 {offsets = [5, 0], sizes = [1, 32], strides = [1, 1]} : vector<8x32xf32> to vector<1x32xf32>
    %13 = vector.shape_cast %12 : vector<1x32xf32> to vector<32xf32>
    %cst = arith.constant dense<0.000000e+00> : vector<16xf32>
    %14 = vector.multi_reduction <add>, %0, %cst [1] : vector<16x32xf32> to vector<16xf32>
    %15 = vector.shape_cast %14 : vector<16xf32> to vector<16x1xf32>
    %cst_3 = arith.constant 3.200000e+01 : f32
    %16 = vector.broadcast %cst_3 : f32 to vector<16x1xf32>
    %17 = arith.divf %15, %16 : vector<16x1xf32>
    %18 = vector.broadcast %17 : vector<16x1xf32> to vector<16x32xf32>
    %19 = arith.subf %0, %18 : vector<16x32xf32>
    %20 = arith.mulf %19, %19 : vector<16x32xf32>
    %cst_4 = arith.constant dense<0.000000e+00> : vector<16xf32>
    %21 = vector.multi_reduction <add>, %20, %cst_4 [1] : vector<16x32xf32> to vector<16xf32>
    %22 = vector.shape_cast %21 : vector<16xf32> to vector<16x1xf32>
    %cst_5 = arith.constant 3.200000e+01 : f32
    %23 = vector.broadcast %cst_5 : f32 to vector<16x1xf32>
    %24 = arith.divf %22, %23 : vector<16x1xf32>
    %25 = vector.broadcast %17 : vector<16x1xf32> to vector<16x32xf32>
    %26 = arith.subf %0, %25 : vector<16x32xf32>
    %cst_6 = arith.constant 9.99999974E-6 : f32
    %27 = vector.broadcast %cst_6 : f32 to vector<16x1xf32>
    %28 = arith.addf %24, %27 : vector<16x1xf32>
    %29 = math.rsqrt %28 : vector<16x1xf32>
    %30 = vector.broadcast %29 : vector<16x1xf32> to vector<16x32xf32>
    %31 = arith.mulf %26, %30 : vector<16x32xf32>
    %32 = vector.shape_cast %3 : vector<32xf32> to vector<1x32xf32>
    %33 = vector.broadcast %32 : vector<1x32xf32> to vector<16x32xf32>
    %34 = arith.mulf %31, %33 : vector<16x32xf32>
    %35 = vector.shape_cast %5 : vector<32xf32> to vector<1x32xf32>
    %36 = vector.broadcast %35 : vector<1x32xf32> to vector<16x32xf32>
    %37 = arith.addf %34, %36 : vector<16x32xf32>
    %c0_7 = arith.constant 0 : index
    %c0_8 = arith.constant 0 : index
    %38 = vector.load %arg2[%c0_7, %c0_8] : memref<32x96xf32, #tpu.memory_space<vmem>>, vector<32x96xf32>
    %cst_9 = arith.constant dense<0.000000e+00> : vector<16x96xf32>
    %39 = tpu.matmul %37, %38, %cst_9 {dimension_numbers = #tpu.dot_dimension_numbers<[1], [0], [0], [1], [0, 0, 1, 1], [], []>} : vector<16x32xf32>, vector<32x96xf32>, vector<16x96xf32> -> vector<16x96xf32>
    %40 = vector.extract_strided_slice %39 {offsets = [0, 0], sizes = [16, 32], strides = [1, 1]} : vector<16x96xf32> to vector<16x32xf32>
    %41 = vector.extract_strided_slice %39 {offsets = [0, 32], sizes = [16, 32], strides = [1, 1]} : vector<16x96xf32> to vector<16x32xf32>
    %42 = vector.extract_strided_slice %39 {offsets = [0, 64], sizes = [16, 32], strides = [1, 1]} : vector<16x96xf32> to vector<16x32xf32>
    %c0_10 = arith.constant 0 : index
    %c0_11 = arith.constant 0 : index
    %43 = vector.load %arg8[%c0_10, %c0_11] : memref<64x32xf32, #tpu.memory_space<vmem>>, vector<64x32xf32>
    %44 = tpu.concatenate %41, %41, %41, %41 in 0 : vector<16x32xf32>, vector<16x32xf32>, vector<16x32xf32>, vector<16x32xf32> -> vector<64x32xf32>
    %45 = arith.mulf %44, %43 : vector<64x32xf32>
    %46 = tpu.concatenate %42, %42, %42, %42 in 0 : vector<16x32xf32>, vector<16x32xf32>, vector<16x32xf32>, vector<16x32xf32> -> vector<64x32xf32>
    %47 = arith.mulf %46, %43 : vector<64x32xf32>
    %cst_12 = arith.constant dense<0.000000e+00> : vector<16x64xf32>
    %48 = tpu.matmul %40, %45, %cst_12 {dimension_numbers = #tpu.dot_dimension_numbers<[1], [1], [0], [0], [0, 0, 1, 0], [], []>} : vector<16x32xf32>, vector<64x32xf32>, vector<16x64xf32> -> vector<16x64xf32>
    %c0_13 = arith.constant 0 : index
    %c0_14 = arith.constant 0 : index
    %49 = vector.load %arg9[%c0_13, %c0_14] : memref<16x64xf32, #tpu.memory_space<vmem>>, vector<16x64xf32>
    %50 = arith.addf %48, %49 : vector<16x64xf32>
    %cst_15 = arith.constant dense<0xFF800000> : vector<16xf32>
    %51 = vector.multi_reduction <maximumf>, %50, %cst_15 [1] : vector<16x64xf32> to vector<16xf32>
    %52 = vector.shape_cast %51 : vector<16xf32> to vector<16x1xf32>
    %53 = vector.broadcast %52 : vector<16x1xf32> to vector<16x64xf32>
    %54 = arith.subf %50, %53 : vector<16x64xf32>
    %55 = math.exp %54 : vector<16x64xf32>
    %c0_16 = arith.constant 0 : index
    %c0_17 = arith.constant 0 : index
    %56 = vector.load %arg10[%c0_16, %c0_17] : memref<64x64xf32, #tpu.memory_space<vmem>>, vector<64x64xf32>
    %cst_18 = arith.constant dense<0.000000e+00> : vector<16x64xf32>
    %57 = tpu.matmul %55, %56, %cst_18 {dimension_numbers = #tpu.dot_dimension_numbers<[1], [0], [0], [1], [0, 0, 1, 1], [], []>} : vector<16x64xf32>, vector<64x64xf32>, vector<16x64xf32> -> vector<16x64xf32>
    %58 = tpu.reciprocal %57 {approx = true} : vector<16x64xf32> -> vector<16x64xf32>
    %59 = arith.mulf %55, %58 : vector<16x64xf32>
    %cst_19 = arith.constant dense<0.000000e+00> : vector<16x32xf32>
    %60 = tpu.matmul %59, %47, %cst_19 {dimension_numbers = #tpu.dot_dimension_numbers<[1], [0], [0], [1], [0, 0, 1, 1], [], []>} : vector<16x64xf32>, vector<64x32xf32>, vector<16x32xf32> -> vector<16x32xf32>
    %c0_20 = arith.constant 0 : index
    %c0_21 = arith.constant 0 : index
    %61 = vector.load %arg3[%c0_20, %c0_21] : memref<32x32xf32, #tpu.memory_space<vmem>>, vector<32x32xf32>
    %cst_22 = arith.constant dense<0.000000e+00> : vector<16x32xf32>
    %62 = tpu.matmul %60, %61, %cst_22 {dimension_numbers = #tpu.dot_dimension_numbers<[1], [0], [0], [1], [0, 0, 1, 1], [], []>} : vector<16x32xf32>, vector<32x32xf32>, vector<16x32xf32> -> vector<16x32xf32>
    %63 = vector.shape_cast %11 : vector<32xf32> to vector<1x32xf32>
    %64 = vector.broadcast %63 : vector<1x32xf32> to vector<16x32xf32>
    %65 = arith.addf %62, %64 : vector<16x32xf32>
    %66 = arith.addf %0, %65 : vector<16x32xf32>
    %cst_23 = arith.constant dense<0.000000e+00> : vector<16xf32>
    %67 = vector.multi_reduction <add>, %66, %cst_23 [1] : vector<16x32xf32> to vector<16xf32>
    %68 = vector.shape_cast %67 : vector<16xf32> to vector<16x1xf32>
    %cst_24 = arith.constant 3.200000e+01 : f32
    %69 = vector.broadcast %cst_24 : f32 to vector<16x1xf32>
    %70 = arith.divf %68, %69 : vector<16x1xf32>
    %71 = vector.broadcast %70 : vector<16x1xf32> to vector<16x32xf32>
    %72 = arith.subf %66, %71 : vector<16x32xf32>
    %73 = arith.mulf %72, %72 : vector<16x32xf32>
    %cst_25 = arith.constant dense<0.000000e+00> : vector<16xf32>
    %74 = vector.multi_reduction <add>, %73, %cst_25 [1] : vector<16x32xf32> to vector<16xf32>
    %75 = vector.shape_cast %74 : vector<16xf32> to vector<16x1xf32>
    %cst_26 = arith.constant 3.200000e+01 : f32
    %76 = vector.broadcast %cst_26 : f32 to vector<16x1xf32>
    %77 = arith.divf %75, %76 : vector<16x1xf32>
    %78 = vector.broadcast %70 : vector<16x1xf32> to vector<16x32xf32>
    %79 = arith.subf %66, %78 : vector<16x32xf32>
    %cst_27 = arith.constant 9.99999974E-6 : f32
    %80 = vector.broadcast %cst_27 : f32 to vector<16x1xf32>
    %81 = arith.addf %77, %80 : vector<16x1xf32>
    %82 = math.rsqrt %81 : vector<16x1xf32>
    %83 = vector.broadcast %82 : vector<16x1xf32> to vector<16x32xf32>
    %84 = arith.mulf %79, %83 : vector<16x32xf32>
    %85 = vector.shape_cast %7 : vector<32xf32> to vector<1x32xf32>
    %86 = vector.broadcast %85 : vector<1x32xf32> to vector<16x32xf32>
    %87 = arith.mulf %84, %86 : vector<16x32xf32>
    %88 = vector.shape_cast %9 : vector<32xf32> to vector<1x32xf32>
    %89 = vector.broadcast %88 : vector<1x32xf32> to vector<16x32xf32>
    %90 = arith.addf %87, %89 : vector<16x32xf32>
    %c0_28 = arith.constant 0 : index
    %c0_29 = arith.constant 0 : index
    %91 = vector.load %arg4[%c0_28, %c0_29] : memref<32x128xf32, #tpu.memory_space<vmem>>, vector<32x128xf32>
    %cst_30 = arith.constant dense<0.000000e+00> : vector<16x128xf32>
    %92 = tpu.matmul %90, %91, %cst_30 {dimension_numbers = #tpu.dot_dimension_numbers<[1], [0], [0], [1], [0, 0, 1, 1], [], []>} : vector<16x32xf32>, vector<32x128xf32>, vector<16x128xf32> -> vector<16x128xf32>
    %c0_31 = arith.constant 0 : index
    %c0_32 = arith.constant 0 : index
    %93 = vector.load %arg7[%c0_31, %c0_32] : memref<1x128xf32, #tpu.memory_space<vmem>>, vector<1x128xf32>
    %94 = vector.shape_cast %93 : vector<1x128xf32> to vector<128xf32>
    %95 = vector.shape_cast %94 : vector<128xf32> to vector<1x128xf32>
    %96 = vector.broadcast %95 : vector<1x128xf32> to vector<16x128xf32>
    %97 = arith.addf %92, %96 : vector<16x128xf32>
    %cst_33 = arith.constant 0.000000e+00 : f32
    %98 = vector.broadcast %cst_33 : f32 to vector<16x128xf32>
    %99 = arith.maximumf %97, %98 : vector<16x128xf32>
    %c0_34 = arith.constant 0 : index
    %c0_35 = arith.constant 0 : index
    %100 = vector.load %arg5[%c0_34, %c0_35] : memref<128x32xf32, #tpu.memory_space<vmem>>, vector<128x32xf32>
    %cst_36 = arith.constant dense<0.000000e+00> : vector<16x32xf32>
    %101 = tpu.matmul %99, %100, %cst_36 {dimension_numbers = #tpu.dot_dimension_numbers<[1], [0], [0], [1], [0, 0, 1, 1], [], []>} : vector<16x128xf32>, vector<128x32xf32>, vector<16x32xf32> -> vector<16x32xf32>
    %102 = vector.shape_cast %13 : vector<32xf32> to vector<1x32xf32>
    %103 = vector.broadcast %102 : vector<1x32xf32> to vector<16x32xf32>
    %104 = arith.addf %101, %103 : vector<16x32xf32>
    %105 = arith.addf %66, %104 : vector<16x32xf32>
    %c0_37 = arith.constant 0 : index
    %c0_38 = arith.constant 0 : index
    %106 = vector.load %arg11[%c0_37, %c0_38] : memref<16x32xf32, #tpu.memory_space<vmem>>, vector<16x32xf32>
    tpu.vector_store %arg11[%c0_37, %c0_38], %105 {strides = array<i32>} : memref<16x32xf32, #tpu.memory_space<vmem>>, vector<16x32xf32>,
    return
  }
  func.func @transform_0(%arg0: i32) -> (i32, i32) {
    %c0_i32 = arith.constant 0 : i32
    %c0_i32_0 = arith.constant 0 : i32
    return %arg0, %c0_i32 : i32, i32
  }
  func.func @transform_1(%arg0: i32) -> (i32, i32) {
    %c0_i32 = arith.constant 0 : i32
    %c0_i32_0 = arith.constant 0 : i32
    %c0_i32_1 = arith.constant 0 : i32
    return %c0_i32, %c0_i32_0 : i32, i32
  }
  func.func @transform_2(%arg0: i32) -> (i32, i32) {
    %c0_i32 = arith.constant 0 : i32
    %c0_i32_0 = arith.constant 0 : i32
    %c0_i32_1 = arith.constant 0 : i32
    return %c0_i32, %c0_i32_0 : i32, i32
  }
  func.func @transform_3(%arg0: i32) -> (i32, i32) {
    %c0_i32 = arith.constant 0 : i32
    %c0_i32_0 = arith.constant 0 : i32
    %c0_i32_1 = arith.constant 0 : i32
    return %c0_i32, %c0_i32_0 : i32, i32
  }
  func.func @transform_4(%arg0: i32) -> (i32, i32) {
    %c0_i32 = arith.constant 0 : i32
    %c0_i32_0 = arith.constant 0 : i32
    %c0_i32_1 = arith.constant 0 : i32
    return %c0_i32, %c0_i32_0 : i32, i32
  }
  func.func @transform_5(%arg0: i32) -> (i32, i32) {
    %c0_i32 = arith.constant 0 : i32
    %c0_i32_0 = arith.constant 0 : i32
    %c0_i32_1 = arith.constant 0 : i32
    return %c0_i32, %c0_i32_0 : i32, i32
  }
  func.func @transform_6(%arg0: i32) -> (i32, i32) {
    %c0_i32 = arith.constant 0 : i32
    %c0_i32_0 = arith.constant 0 : i32
    %c0_i32_1 = arith.constant 0 : i32
    return %c0_i32, %c0_i32_0 : i32, i32
  }
  func.func @transform_7(%arg0: i32) -> (i32, i32) {
    %c0_i32 = arith.constant 0 : i32
    %c0_i32_0 = arith.constant 0 : i32
    %c0_i32_1 = arith.constant 0 : i32
    return %c0_i32, %c0_i32_0 : i32, i32
  }
  func.func @transform_8(%arg0: i32) -> (i32, i32) {
    %c0_i32 = arith.constant 0 : i32
    %c0_i32_0 = arith.constant 0 : i32
    %c0_i32_1 = arith.constant 0 : i32
    return %c0_i32, %c0_i32_0 : i32, i32
  }
  func.func @transform_9(%arg0: i32) -> (i32, i32) {
    %c0_i32 = arith.constant 0 : i32
    %c0_i32_0 = arith.constant 0 : i32
    %c0_i32_1 = arith.constant 0 : i32
    return %c0_i32, %c0_i32_0 : i32, i32
  }
  func.func @transform_10(%arg0: i32) -> (i32, i32) {
    %c0_i32 = arith.constant 0 : i32
    %c0_i32_0 = arith.constant 0 : i32
    return %arg0, %c0_i32 : i32, i32
  }
}

</mosaic_0001>

<llo_original>
// kernel: tpu_custom_call.1
$region0: #{tpu_custom_call.1}
  #allocation0 [shape = 'u32[]', space=smem, size = 0x4, offset = 0x4, fixed_abs, tag = 'smem constant byte address 0x4 - core index']
  #allocation1 [shape = 'u32[144,128]{1,0:T(1,128)}', space=vmem, size = 0x12000, scoped, tag = 'internal scratch']
  %s0 = inlined_call_operand.vmem [shape: f32[16,32], index: 0, kind: input, shape index: {}]
  %s1 = inlined_call_operand.vmem [shape: f32[32,96], index: 1, kind: input, shape index: {}]
  %s2 = inlined_call_operand.vmem [shape: f32[32,32], index: 2, kind: input, shape index: {}]
  %s3 = inlined_call_operand.vmem [shape: f32[32,128], index: 3, kind: input, shape index: {}]
  %s4 = inlined_call_operand.vmem [shape: f32[128,32], index: 4, kind: input, shape index: {}]
  %s5 = inlined_call_operand.vmem [shape: f32[8,32], index: 5, kind: input, shape index: {}]
  %s6 = inlined_call_operand.vmem [shape: f32[1,128], index: 6, kind: input, shape index: {}]
  %s7 = inlined_call_operand.vmem [shape: f32[64,32], index: 7, kind: input, shape index: {}]
  %s8 = inlined_call_operand.vmem [shape: f32[16,64], index: 8, kind: input, shape index: {}]
  %s9 = inlined_call_operand.vmem [shape: f32[64,64], index: 9, kind: input, shape index: {}]
  %s10 = inlined_call_operand.hbm [shape: f32[16,32], index: 10, kind: output, shape index: {}]
  %s11 = sld [smem:[#allocation0]]
  $region50: #{tpu_custom_call.1} parent=0
    _
  %s13 = ssub.s32 1, %s11
  %s14 = scalar_select 0, %s13, %s11
  $region1: #{tpu_custom_call.1} parent=0
    #allocation2 [shape = 'u8[8192]{0}', space=vmem, size = 0x2000, scoped, tag = 'output window, operand 0, single buffered']
    #allocation3 [shape = 's32[1]{0}', space=sflag, size = 0x4, scoped, tag = 'scoped memory for tpu_custom_call.1']
    %15 = vsyncpa [#allocation3], 0
    // Predicated region
    $region2: #{tpu_custom_call.1} parent=1 // pred_check
      _
    $region3: #{tpu_custom_call.1} parent=1 // pred_check_branch
      %17 = sbr.rel (0) target = $region5
    $region4: #{tpu_custom_call.1} parent=1 // pred_region
      _
    $region5: #{tpu_custom_call.1} parent=1 // pred_fallthru
      _
    // Predicated region
    $region6: #{tpu_custom_call.1} parent=1 // pred_check
      _
    $region7: #{tpu_custom_call.1} parent=1 // pred_check_branch
      %19 = sbr.rel (0) target = $region9
    $region8: #{tpu_custom_call.1} parent=1 // pred_region
      _
    $region9: #{tpu_custom_call.1} parent=1 // pred_fallthru
      _
    // Predicated region
    $region10: #{tpu_custom_call.1} parent=1 // pred_check
      _
    $region11: #{tpu_custom_call.1} parent=1 // pred_check_branch
      %21 = sbr.rel (0) target = $region13
    $region12: #{tpu_custom_call.1} parent=1 // pred_region
      _
    $region13: #{tpu_custom_call.1} parent=1 // pred_fallthru
      _
    // Predicated region
    $region14: #{tpu_custom_call.1} parent=1 // pred_check
      _
    $region15: #{tpu_custom_call.1} parent=1 // pred_check_branch
      %23 = sbr.rel (0) target = $region17
    $region16: #{tpu_custom_call.1} parent=1 // pred_region
      _
    $region17: #{tpu_custom_call.1} parent=1 // pred_fallthru
      _
    // Predicated region
    $region18: #{tpu_custom_call.1} parent=1 // pred_check
      _
    $region19: #{tpu_custom_call.1} parent=1 // pred_check_branch
      %25 = sbr.rel (0) target = $region21
    $region20: #{tpu_custom_call.1} parent=1 // pred_region
      _
    $region21: #{tpu_custom_call.1} parent=1 // pred_fallthru
      _
    // Predicated region
    $region22: #{tpu_custom_call.1} parent=1 // pred_check
      _
    $region23: #{tpu_custom_call.1} parent=1 // pred_check_branch
      %27 = sbr.rel (0) target = $region25
    $region24: #{tpu_custom_call.1} parent=1 // pred_region
      _
    $region25: #{tpu_custom_call.1} parent=1 // pred_fallthru
      _
    // Predicated region
    $region26: #{tpu_custom_call.1} parent=1 // pred_check
      _
    $region27: #{tpu_custom_call.1} parent=1 // pred_check_branch
      %29 = sbr.rel (0) target = $region29
    $region28: #{tpu_custom_call.1} parent=1 // pred_region
      _
    $region29: #{tpu_custom_call.1} parent=1 // pred_fallthru
      _
    // Predicated region
    $region30: #{tpu_custom_call.1} parent=1 // pred_check
      _
    $region31: #{tpu_custom_call.1} parent=1 // pred_check_branch
      %31 = sbr.rel (0) target = $region33
    $region32: #{tpu_custom_call.1} parent=1 // pred_region
      _
    $region33: #{tpu_custom_call.1} parent=1 // pred_fallthru
      _
    // Predicated region
    $region34: #{tpu_custom_call.1} parent=1 // pred_check
      _
    $region35: #{tpu_custom_call.1} parent=1 // pred_check_branch
      %33 = sbr.rel (0) target = $region37
    $region36: #{tpu_custom_call.1} parent=1 // pred_region
      _
    $region37: #{tpu_custom_call.1} parent=1 // pred_fallthru
      _
    // Predicated region
    $region38: #{tpu_custom_call.1} parent=1 // pred_check
      _
    $region39: #{tpu_custom_call.1} parent=1 // pred_check_branch
      %35 = sbr.rel (0) target = $region41
    $region40: #{tpu_custom_call.1} parent=1 // pred_region
      _
    $region41: #{tpu_custom_call.1} parent=1 // pred_fallthru
      _
    %v36 = vld [vmem:[%s0] sm:$0xff]
    %v37 = vld [vmem:[%s0 + $0x8] sm:$0xff]
    %v38 = vld [vmem:[%s5] sm:$0xff]
    %vm39 = vcmask 261120
    %v40 = vsel %vm39, %v36, 0.0
    %41 = vadd.xlane.f32.xlu0 %v40
    %v42 = vpop.xlane.xlu0 %41
    %v43 = vsel %vm39, %v37, 0.0
    %44 = vadd.xlane.f32.xlu0 %v43
    %v45 = vpop.xlane.xlu0 %44
    %v46 = vrcp.pop 32.0
    %v47 = vmul.f32 %v42, %v46
    %v48 = vmul.f32 %v45, %v46
    %v49 = vsub.f32 %v36, %v47
    %v50 = vsub.f32 %v37, %v48
    %v51 = vmul.f32 %v49, %v49
    %v52 = vmul.f32 %v50, %v50
    %v53 = vsel %vm39, %v51, 0.0
    %54 = vadd.xlane.f32.xlu0 %v53
    %v55 = vpop.xlane.xlu0 %54
    %v56 = vsel %vm39, %v52, 0.0
    %57 = vadd.xlane.f32.xlu0 %v56
    %v58 = vpop.xlane.xlu0 %57
    %v59 = vmul.f32 %v55, %v46
    %v60 = vmul.f32 %v58, %v46
    %v61 = vadd.f32 %v59, 1e-05
    %v62 = vadd.f32 %v60, 1e-05
    %v63 = vrsqrt.pop %v61
    %v64 = vrsqrt.pop %v62
    %v65 = vmul.f32 %v49, %v63
    %v66 = vmul.f32 %v50, %v64
    %v67 = vlaneseq
    %v68 = vshrl.u32 %v67, 7
    %v69 = vsub.s32 0, %v68
    %v70 = vrot.slane %v38, %v69
    %v71 = vmul.f32 %v65, %v70
    %v72 = vmul.f32 %v66, %v70
    %v73 = vlaneseq
    %v74 = vshrl.u32 %v73, 7
    %v75 = vsub.s32 1, %v74
    %v76 = vrot.slane %v38, %v75
    %v77 = vadd.f32 %v71, %v76
    %v78 = vadd.f32 %v72, %v76
    %v79 = vld [vmem:[%s1] sm:$0xff]
    %v80 = vld [vmem:[%s1 + $0x8] sm:$0xff]
    %v81 = vld [vmem:[%s1 + $0x10] sm:$0xff]
    %v82 = vld [vmem:[%s1 + $0x18] sm:$0xff]
    %v84 = vsel %vm39, %v77, 0
    %v87 = vsel %vm39, %v78, 0
    %89 = vmatprep.subr.mxu0 0.0
    %90 = vmatpush1.msra.mxu0 %v79
    %91 = vmatprep.subr.mxu0 0.0
    %92 = vmatpush1.msra.mxu0 %v80
    %93 = vmatprep.subr.mxu0 0.0
    %94 = vmatpush1.msra.mxu0 %v81
    %95 = vmatprep.subr.mxu0 0.0
    %96 = vmatpush1.msra.mxu0 %v82
    %97 = vmatprep.subr.mxu0 0.0
    %98 = vmatpush1.msra.mxu0 0.0
    %99 = vmatprep.subr.mxu0 0.0
    %100 = vmatpush1.msra.mxu0 0.0
    %101 = vmatprep.subr.mxu0 0.0
    %102 = vmatpush1.msra.mxu0 0.0
    %103 = vmatprep.subr.mxu0 0.0
    %104 = vmatpush1.msra.mxu0 0.0
    %105 = vmatprep.subr.mxu0 0.0
    %106 = vmatpush1.msra.mxu0 0.0
    %107 = vmatprep.subr.mxu0 0.0
    %108 = vmatpush1.msra.mxu0 0.0
    %109 = vmatprep.subr.mxu0 0.0
    %110 = vmatpush1.msra.mxu0 0.0
    %111 = vmatprep.subr.mxu0 0.0
    %112 = vmatpush1.msra.mxu0 0.0
    %113 = vmatprep.subr.mxu0 0.0
    %114 = vmatpush1.msra.mxu0 0.0
    %115 = vmatprep.subr.mxu0 0.0
    %116 = vmatpush1.msra.mxu0 0.0
    %117 = vmatprep.subr.mxu0 0.0
    %118 = vmatpush1.msra.mxu0 0.0
    %119 = vmatprep.subr.mxu0 0.0
    %120 = vmatpush1.msra.mxu0 0.0
    %121 = vmatprep.subr.mxu0 0.0
    %122 = vmatpush1.msra.mxu0 0.0
    %123 = vmatprep.subr.mxu0 0.0
    %124 = vmatpush1.msra.mxu0 0.0
    %125 = vmatprep.subr.mxu0 0.0
    %126 = vmatpush1.msra.mxu0 0.0
    %127 = vmatprep.subr.mxu0 0.0
    %128 = vmatpush1.msra.mxu0 0.0
    %129 = vmatprep.subr.mxu0 0.0
    %130 = vmatpush1.msra.mxu0 0.0
    %131 = vmatprep.subr.mxu0 0.0
    %132 = vmatpush1.msra.mxu0 0.0
    %133 = vmatprep.subr.mxu0 0.0
    %134 = vmatpush1.msra.mxu0 0.0
    %135 = vmatprep.subr.mxu0 0.0
    %136 = vmatpush1.msra.mxu0 0.0
    %137 = vmatprep.subr.mxu0 0.0
    %138 = vmatpush1.msra.mxu0 0.0
    %139 = vmatprep.subr.mxu0 0.0
    %140 = vmatpush1.msra.mxu0 0.0
    %141 = vmatprep.subr.mxu0 0.0
    %142 = vmatpush1.msra.mxu0 0.0
    %143 = vmatprep.subr.mxu0 0.0
    %144 = vmatpush1.msra.mxu0 0.0
    %145 = vmatprep.subr.mxu0 0.0
    %146 = vmatpush1.msra.mxu0 0.0
    %147 = vmatprep.subr.mxu0 0.0
    %148 = vmatpush1.msra.mxu0 0.0
    %149 = vmatprep.subr.mxu0 0.0
    %150 = vmatpush1.msra.mxu0 0.0
    %151 = vmatprep.subr.mxu0 0.0
    %152 = vmatpush1.msra.mxu0 0.0
    %153 = vmatprep.mubr.f32.mxu0 0.0
    %154 = vmatmul.mubr.f32.gmra.mrb[0].mxu0 %v84
    %v155 = vpop.f32.mrb[0].mxu0
    %v156 = vadd.f32 0.0, %v155
    %v157 = vpop.f32.mrb[0].mxu0
    %158 = vmatprep.mubr.f32.mxu0 0.0
    %159 = vmatmul.mubr.f32.gmra.mrb[0].mxu0 %v87
    %v160 = vpop.f32.mrb[0].mxu0
    %v161 = vadd.f32 0.0, %v160
    %v162 = vpop.f32.mrb[0].mxu0
    %163 = vdwg.mxu0
    %v164 = vld [vmem:[%s7] sm:$0xff]
    %v165 = vld [vmem:[%s7 + $0x8] sm:$0xff]
    %v166 = vld [vmem:[%s7 + $0x10] sm:$0xff]
    %v167 = vld [vmem:[%s7 + $0x18] sm:$0xff]
    %v168 = vld [vmem:[%s7 + $0x20] sm:$0xff]
    %v169 = vld [vmem:[%s7 + $0x28] sm:$0xff]
    %v170 = vld [vmem:[%s7 + $0x30] sm:$0xff]
    %v171 = vld [vmem:[%s7 + $0x38] sm:$0xff]
    %180 = vrot.lane.b32.xlu0 %v164, 32
    %v181 = vpop.permute.xlu0 %180
    %182 = vrot.lane.b32.xlu0 %v165, 32
    %v183 = vpop.permute.xlu0 %182
    %184 = vrot.lane.b32.xlu0 %v166, 32
    %v185 = vpop.permute.xlu0 %184
    %186 = vrot.lane.b32.xlu0 %v167, 32
    %v187 = vpop.permute.xlu0 %186
    %188 = vrot.lane.b32.xlu0 %v168, 32
    %v189 = vpop.permute.xlu0 %188
    %190 = vrot.lane.b32.xlu0 %v169, 32
    %v191 = vpop.permute.xlu0 %190
    %192 = vrot.lane.b32.xlu0 %v170, 32
    %v193 = vpop.permute.xlu0 %192
    %194 = vrot.lane.b32.xlu0 %v171, 32
    %v195 = vpop.permute.xlu0 %194
    %v204 = vmul.f32 %v156, %v181
    %v205 = vmul.f32 %v161, %v183
    %v206 = vmul.f32 %v156, %v185
    %v207 = vmul.f32 %v161, %v187
    %v208 = vmul.f32 %v156, %v189
    %v209 = vmul.f32 %v161, %v191
    %v210 = vmul.f32 %v156, %v193
    %v211 = vmul.f32 %v161, %v195
    %212 = vrot.lane.b32.xlu0 %v164, 64
    %v213 = vpop.permute.xlu0 %212
    %214 = vrot.lane.b32.xlu0 %v165, 64
    %v215 = vpop.permute.xlu0 %214
    %216 = vrot.lane.b32.xlu0 %v166, 64
    %v217 = vpop.permute.xlu0 %216
    %218 = vrot.lane.b32.xlu0 %v167, 64
    %v219 = vpop.permute.xlu0 %218
    %220 = vrot.lane.b32.xlu0 %v168, 64
    %v221 = vpop.permute.xlu0 %220
    %222 = vrot.lane.b32.xlu0 %v169, 64
    %v223 = vpop.permute.xlu0 %222
    %224 = vrot.lane.b32.xlu0 %v170, 64
    %v225 = vpop.permute.xlu0 %224
    %226 = vrot.lane.b32.xlu0 %v171, 64
    %v227 = vpop.permute.xlu0 %226
    %v236 = vmul.f32 %v156, %v213
    %v237 = vmul.f32 %v161, %v215
    %v238 = vmul.f32 %v156, %v217
    %v239 = vmul.f32 %v161, %v219
    %v240 = vmul.f32 %v156, %v221
    %v241 = vmul.f32 %v161, %v223
    %v242 = vmul.f32 %v156, %v225
    %v243 = vmul.f32 %v161, %v227
    %v244 = vld [vmem:[%s8] sm:$0xff]
    %v245 = vld [vmem:[%s8 + $0x8] sm:$0xff]
    %254 = vrot.lane.b32.xlu0 %v204, 96
    %v255 = vpop.permute.xlu0 %254
    %256 = vrot.lane.b32.xlu0 %v205, 96
    %v257 = vpop.permute.xlu0 %256
    %258 = vrot.lane.b32.xlu0 %v206, 96
    %v259 = vpop.permute.xlu0 %258
    %260 = vrot.lane.b32.xlu0 %v207, 96
    %v261 = vpop.permute.xlu0 %260
    %262 = vrot.lane.b32.xlu0 %v208, 96
    %v263 = vpop.permute.xlu0 %262
    %264 = vrot.lane.b32.xlu0 %v209, 96
    %v265 = vpop.permute.xlu0 %264
    %266 = vrot.lane.b32.xlu0 %v210, 96
    %v267 = vpop.permute.xlu0 %266
    %268 = vrot.lane.b32.xlu0 %v211, 96
    %v269 = vpop.permute.xlu0 %268
    %v271 = vsel %vm39, %v156, 0
    %v274 = vsel %vm39, %v161, 0
    %v276 = vsel %vm39, %v255, 0
    %v278 = vsel %vm39, %v257, 0
    %v280 = vsel %vm39, %v259, 0
    %v282 = vsel %vm39, %v261, 0
    %v284 = vsel %vm39, %v263, 0
    %v286 = vsel %vm39, %v265, 0
    %v288 = vsel %vm39, %v267, 0
    %v290 = vsel %vm39, %v269, 0
    %292 = vmatprep.subr.mxu0 0.0
    %293 = vmatpush1.xpose.msra.mxu0 %v276
    %294 = vmatprep.subr.mxu0 0.0
    %295 = vmatpush1.xpose.msra.mxu0 %v278
    %296 = vmatprep.subr.mxu0 0.0
    %297 = vmatpush1.xpose.msra.mxu0 %v280
    %298 = vmatprep.subr.mxu0 0.0
    %299 = vmatpush1.xpose.msra.mxu0 %v282
    %300 = vmatprep.subr.mxu0 0.0
    %301 = vmatpush1.xpose.msra.mxu0 %v284
    %302 = vmatprep.subr.mxu0 0.0
    %303 = vmatpush1.xpose.msra.mxu0 %v286
    %304 = vmatprep.subr.mxu0 0.0
    %305 = vmatpush1.xpose.msra.mxu0 %v288
    %306 = vmatprep.subr.mxu0 0.0
    %307 = vmatpush1.xpose.msra.mxu0 %v290
    %308 = vmatprep.subr.mxu0 0.0
    %309 = vmatpush1.xpose.msra.mxu0 0.0
    %310 = vmatprep.subr.mxu0 0.0
    %311 = vmatpush1.xpose.msra.mxu0 0.0
    %312 = vmatprep.subr.mxu0 0.0
    %313 = vmatpush1.xpose.msra.mxu0 0.0
    %314 = vmatprep.subr.mxu0 0.0
    %315 = vmatpush1.xpose.msra.mxu0 0.0
    %316 = vmatprep.subr.mxu0 0.0
    %317 = vmatpush1.xpose.msra.mxu0 0.0
    %318 = vmatprep.subr.mxu0 0.0
    %319 = vmatpush1.xpose.msra.mxu0 0.0
    %320 = vmatprep.subr.mxu0 0.0
    %321 = vmatpush1.xpose.msra.mxu0 0.0
    %322 = vmatprep.subr.mxu0 0.0
    %323 = vmatpush1.xpose.msra.mxu0 0.0
    %324 = vmatprep.subr.mxu0 0.0
    %325 = vmatpush1.xpose.msra.mxu0 0.0
    %326 = vmatprep.subr.mxu0 0.0
    %327 = vmatpush1.xpose.msra.mxu0 0.0
    %328 = vmatprep.subr.mxu0 0.0
    %329 = vmatpush1.xpose.msra.mxu0 0.0
    %330 = vmatprep.subr.mxu0 0.0
    %331 = vmatpush1.xpose.msra.mxu0 0.0
    %332 = vmatprep.subr.mxu0 0.0
    %333 = vmatpush1.xpose.msra.mxu0 0.0
    %334 = vmatprep.subr.mxu0 0.0
    %335 = vmatpush1.xpose.msra.mxu0 0.0
    %336 = vmatprep.subr.mxu0 0.0
    %337 = vmatpush1.xpose.msra.mxu0 0.0
    %338 = vmatprep.subr.mxu0 0.0
    %339 = vmatpush1.xpose.msra.mxu0 0.0
    %340 = vmatprep.subr.mxu0 0.0
    %341 = vmatpush1.xpose.msra.mxu0 0.0
    %342 = vmatprep.subr.mxu0 0.0
    %343 = vmatpush1.xpose.msra.mxu0 0.0
    %344 = vmatprep.subr.mxu0 0.0
    %345 = vmatpush1.xpose.msra.mxu0 0.0
    %346 = vmatprep.subr.mxu0 0.0
    %347 = vmatpush1.xpose.msra.mxu0 0.0
    %348 = vmatprep.subr.mxu0 0.0
    %349 = vmatpush1.xpose.msra.mxu0 0.0
    %350 = vmatprep.subr.mxu0 0.0
    %351 = vmatpush1.xpose.msra.mxu0 0.0
    %352 = vmatprep.subr.mxu0 0.0
    %353 = vmatpush1.xpose.msra.mxu0 0.0
    %354 = vmatprep.subr.mxu0 0.0
    %355 = vmatpush1.xpose.msra.mxu0 0.0
    %356 = vmatprep.mubr.f32.mxu0 0.0
    %357 = vmatmul.mubr.f32.gmra.mrb[0].mxu0 %v271
    %v358 = vpop.f32.mrb[0].mxu0
    %v359 = vadd.f32 %v244, %v358
    %v360 = vpop.f32.mrb[0].mxu0
    %361 = vmatprep.mubr.f32.mxu0 0.0
    %362 = vmatmul.mubr.f32.gmra.mrb[0].mxu0 %v274
    %v363 = vpop.f32.mrb[0].mxu0
    %v364 = vadd.f32 %v245, %v363
    %v365 = vpop.f32.mrb[0].mxu0
    %366 = vdwg.mxu0
    %vm367 = vcmask 523264
    %v368 = vsel %vm367, %v359, -inf
    %369 = vmax.xlane.f32.xlu0 %v368
    %v370 = vpop.xlane.xlu0 %369
    %v371 = vsel %vm367, %v364, -inf
    %372 = vmax.xlane.f32.xlu0 %v371
    %v373 = vpop.xlane.xlu0 %372
    %v374 = vsub.f32 %v359, %v370
    %v375 = vsub.f32 %v364, %v373
    %v376 = vmul.f32 %v374, 1.442695
    %v377 = vpow.pop %v376
    %v378 = vmul.f32 %v375, 1.442695
    %v379 = vpow.pop %v378
    %v380 = vld [vmem:[%s9] sm:$0xff]
    %v381 = vld [vmem:[%s9 + $0x8] sm:$0xff]
    %v382 = vld [vmem:[%s9 + $0x10] sm:$0xff]
    %v383 = vld [vmem:[%s9 + $0x18] sm:$0xff]
    %v384 = vld [vmem:[%s9 + $0x20] sm:$0xff]
    %v385 = vld [vmem:[%s9 + $0x28] sm:$0xff]
    %v386 = vld [vmem:[%s9 + $0x30] sm:$0xff]
    %v387 = vld [vmem:[%s9 + $0x38] sm:$0xff]
    %v389 = vsel %vm367, %v377, 0
    %v392 = vsel %vm367, %v379, 0
    %394 = vmatprep.subr.mxu0 0.0
    %395 = vmatpush1.msra.mxu0 %v380
    %396 = vmatprep.subr.mxu0 0.0
    %397 = vmatpush1.msra.mxu0 %v381
    %398 = vmatprep.subr.mxu0 0.0
    %399 = vmatpush1.msra.mxu0 %v382
    %400 = vmatprep.subr.mxu0 0.0
    %401 = vmatpush1.msra.mxu0 %v383
    %402 = vmatprep.subr.mxu0 0.0
    %403 = vmatpush1.msra.mxu0 %v384
    %404 = vmatprep.subr.mxu0 0.0
    %405 = vmatpush1.msra.mxu0 %v385
    %406 = vmatprep.subr.mxu0 0.0
    %407 = vmatpush1.msra.mxu0 %v386
    %408 = vmatprep.subr.mxu0 0.0
    %409 = vmatpush1.msra.mxu0 %v387
    %410 = vmatprep.subr.mxu0 0.0
    %411 = vmatpush1.msra.mxu0 0.0
    %412 = vmatprep.subr.mxu0 0.0
    %413 = vmatpush1.msra.mxu0 0.0
    %414 = vmatprep.subr.mxu0 0.0
    %415 = vmatpush1.msra.mxu0 0.0
    %416 = vmatprep.subr.mxu0 0.0
    %417 = vmatpush1.msra.mxu0 0.0
    %418 = vmatprep.subr.mxu0 0.0
    %419 = vmatpush1.msra.mxu0 0.0
    %420 = vmatprep.subr.mxu0 0.0
    %421 = vmatpush1.msra.mxu0 0.0
    %422 = vmatprep.subr.mxu0 0.0
    %423 = vmatpush1.msra.mxu0 0.0
    %424 = vmatprep.subr.mxu0 0.0
    %425 = vmatpush1.msra.mxu0 0.0
    %426 = vmatprep.subr.mxu0 0.0
    %427 = vmatpush1.msra.mxu0 0.0
    %428 = vmatprep.subr.mxu0 0.0
    %429 = vmatpush1.msra.mxu0 0.0
    %430 = vmatprep.subr.mxu0 0.0
    %431 = vmatpush1.msra.mxu0 0.0
    %432 = vmatprep.subr.mxu0 0.0
    %433 = vmatpush1.msra.mxu0 0.0
    %434 = vmatprep.subr.mxu0 0.0
    %435 = vmatpush1.msra.mxu0 0.0
    %436 = vmatprep.subr.mxu0 0.0
    %437 = vmatpush1.msra.mxu0 0.0
    %438 = vmatprep.subr.mxu0 0.0
    %439 = vmatpush1.msra.mxu0 0.0
    %440 = vmatprep.subr.mxu0 0.0
    %441 = vmatpush1.msra.mxu0 0.0
    %442 = vmatprep.subr.mxu0 0.0
    %443 = vmatpush1.msra.mxu0 0.0
    %444 = vmatprep.subr.mxu0 0.0
    %445 = vmatpush1.msra.mxu0 0.0
    %446 = vmatprep.subr.mxu0 0.0
    %447 = vmatpush1.msra.mxu0 0.0
    %448 = vmatprep.subr.mxu0 0.0
    %449 = vmatpush1.msra.mxu0 0.0
    %450 = vmatprep.subr.mxu0 0.0
    %451 = vmatpush1.msra.mxu0 0.0
    %452 = vmatprep.subr.mxu0 0.0
    %453 = vmatpush1.msra.mxu0 0.0
    %454 = vmatprep.subr.mxu0 0.0
    %455 = vmatpush1.msra.mxu0 0.0
    %456 = vmatprep.subr.mxu0 0.0
    %457 = vmatpush1.msra.mxu0 0.0
    %458 = vmatprep.mubr.f32.mxu0 0.0
    %459 = vmatmul.mubr.f32.gmra.mrb[0].mxu0 %v389
    %v460 = vpop.f32.mrb[0].mxu0
    %v461 = vadd.f32 0.0, %v460
    %v462 = vpop.f32.mrb[0].mxu0
    %463 = vmatprep.mubr.f32.mxu0 0.0
    %464 = vmatmul.mubr.f32.gmra.mrb[0].mxu0 %v392
    %v465 = vpop.f32.mrb[0].mxu0
    %v466 = vadd.f32 0.0, %v465
    %v467 = vpop.f32.mrb[0].mxu0
    %468 = vdwg.mxu0
    %v469 = vrcp.pop %v461
    %v470 = vrcp.pop %v466
    %v471 = vmul.f32 %v377, %v469
    %v472 = vmul.f32 %v379, %v470
    %481 = vrot.lane.b32.xlu0 %v236, 64
    %v482 = vpop.permute.xlu0 %481
    %483 = vrot.lane.b32.xlu0 %v237, 64
    %v484 = vpop.permute.xlu0 %483
    %485 = vrot.lane.b32.xlu0 %v238, 64
    %v486 = vpop.permute.xlu0 %485
    %487 = vrot.lane.b32.xlu0 %v239, 64
    %v488 = vpop.permute.xlu0 %487
    %489 = vrot.lane.b32.xlu0 %v240, 64
    %v490 = vpop.permute.xlu0 %489
    %491 = vrot.lane.b32.xlu0 %v241, 64
    %v492 = vpop.permute.xlu0 %491
    %493 = vrot.lane.b32.xlu0 %v242, 64
    %v494 = vpop.permute.xlu0 %493
    %495 = vrot.lane.b32.xlu0 %v243, 64
    %v496 = vpop.permute.xlu0 %495
    %v506 = vsel %vm367, %v471, 0
    %v509 = vsel %vm367, %v472, 0
    %511 = vmatprep.subr.mxu0 0.0
    %512 = vmatpush1.msra.mxu0 %v482
    %513 = vmatprep.subr.mxu0 0.0
    %514 = vmatpush1.msra.mxu0 %v484
    %515 = vmatprep.subr.mxu0 0.0
    %516 = vmatpush1.msra.mxu0 %v486
    %517 = vmatprep.subr.mxu0 0.0
    %518 = vmatpush1.msra.mxu0 %v488
    %519 = vmatprep.subr.mxu0 0.0
    %520 = vmatpush1.msra.mxu0 %v490
    %521 = vmatprep.subr.mxu0 0.0
    %522 = vmatpush1.msra.mxu0 %v492
    %523 = vmatprep.subr.mxu0 0.0
    %524 = vmatpush1.msra.mxu0 %v494
    %525 = vmatprep.subr.mxu0 0.0
    %526 = vmatpush1.msra.mxu0 %v496
    %527 = vmatprep.subr.mxu0 0.0
    %528 = vmatpush1.msra.mxu0 0.0
    %529 = vmatprep.subr.mxu0 0.0
    %530 = vmatpush1.msra.mxu0 0.0
    %531 = vmatprep.subr.mxu0 0.0
    %532 = vmatpush1.msra.mxu0 0.0
    %533 = vmatprep.subr.mxu0 0.0
    %534 = vmatpush1.msra.mxu0 0.0
    %535 = vmatprep.subr.mxu0 0.0
    %536 = vmatpush1.msra.mxu0 0.0
    %537 = vmatprep.subr.mxu0 0.0
    %538 = vmatpush1.msra.mxu0 0.0
    %539 = vmatprep.subr.mxu0 0.0
    %540 = vmatpush1.msra.mxu0 0.0
    %541 = vmatprep.subr.mxu0 0.0
    %542 = vmatpush1.msra.mxu0 0.0
    %543 = vmatprep.subr.mxu0 0.0
    %544 = vmatpush1.msra.mxu0 0.0
    %545 = vmatprep.subr.mxu0 0.0
    %546 = vmatpush1.msra.mxu0 0.0
    %547 = vmatprep.subr.mxu0 0.0
    %548 = vmatpush1.msra.mxu0 0.0
    %549 = vmatprep.subr.mxu0 0.0
    %550 = vmatpush1.msra.mxu0 0.0
    %551 = vmatprep.subr.mxu0 0.0
    %552 = vmatpush1.msra.mxu0 0.0
    %553 = vmatprep.subr.mxu0 0.0
    %554 = vmatpush1.msra.mxu0 0.0
    %555 = vmatprep.subr.mxu0 0.0
    %556 = vmatpush1.msra.mxu0 0.0
    %557 = vmatprep.subr.mxu0 0.0
    %558 = vmatpush1.msra.mxu0 0.0
    %559 = vmatprep.subr.mxu0 0.0
    %560 = vmatpush1.msra.mxu0 0.0
    %561 = vmatprep.subr.mxu0 0.0
    %562 = vmatpush1.msra.mxu0 0.0
    %563 = vmatprep.subr.mxu0 0.0
    %564 = vmatpush1.msra.mxu0 0.0
    %565 = vmatprep.subr.mxu0 0.0
    %566 = vmatpush1.msra.mxu0 0.0
    %567 = vmatprep.subr.mxu0 0.0
    %568 = vmatpush1.msra.mxu0 0.0
    %569 = vmatprep.subr.mxu0 0.0
    %570 = vmatpush1.msra.mxu0 0.0
    %571 = vmatprep.subr.mxu0 0.0
    %572 = vmatpush1.msra.mxu0 0.0
    %573 = vmatprep.subr.mxu0 0.0
    %574 = vmatpush1.msra.mxu0 0.0
    %575 = vmatprep.mubr.f32.mxu0 0.0
    %576 = vmatmul.mubr.f32.gmra.mrb[0].mxu0 %v506
    %v577 = vpop.f32.mrb[0].mxu0
    %v578 = vadd.f32 0.0, %v577
    %v579 = vpop.f32.mrb[0].mxu0
    %580 = vmatprep.mubr.f32.mxu0 0.0
    %581 = vmatmul.mubr.f32.gmra.mrb[0].mxu0 %v509
    %v582 = vpop.f32.mrb[0].mxu0
    %v583 = vadd.f32 0.0, %v582
    %v584 = vpop.f32.mrb[0].mxu0
    %585 = vdwg.mxu0
    %v586 = vld [vmem:[%s2] sm:$0xff]
    %v587 = vld [vmem:[%s2 + $0x8] sm:$0xff]
    %v588 = vld [vmem:[%s2 + $0x10] sm:$0xff]
    %v589 = vld [vmem:[%s2 + $0x18] sm:$0xff]
    %v590 = vlaneseq
    %v591 = vshrl.u32 %v590, 7
    %v592 = vsub.s32 4, %v591
    %v593 = vrot.slane %v38, %v592
    %v595 = vsel %vm39, %v578, 0
    %v598 = vsel %vm39, %v583, 0
    %600 = vmatprep.subr.mxu0 0.0
    %601 = vmatpush1.msra.mxu0 %v586
    %602 = vmatprep.subr.mxu0 0.0
    %603 = vmatpush1.msra.mxu0 %v587
    %604 = vmatprep.subr.mxu0 0.0
    %605 = vmatpush1.msra.mxu0 %v588
    %606 = vmatprep.subr.mxu0 0.0
    %607 = vmatpush1.msra.mxu0 %v589
    %608 = vmatprep.subr.mxu0 0.0
    %609 = vmatpush1.msra.mxu0 0.0
    %610 = vmatprep.subr.mxu0 0.0
    %611 = vmatpush1.msra.mxu0 0.0
    %612 = vmatprep.subr.mxu0 0.0
    %613 = vmatpush1.msra.mxu0 0.0
    %614 = vmatprep.subr.mxu0 0.0
    %615 = vmatpush1.msra.mxu0 0.0
    %616 = vmatprep.subr.mxu0 0.0
    %617 = vmatpush1.msra.mxu0 0.0
    %618 = vmatprep.subr.mxu0 0.0
    %619 = vmatpush1.msra.mxu0 0.0
    %620 = vmatprep.subr.mxu0 0.0
    %621 = vmatpush1.msra.mxu0 0.0
    %622 = vmatprep.subr.mxu0 0.0
    %623 = vmatpush1.msra.mxu0 0.0
    %624 = vmatprep.subr.mxu0 0.0
    %625 = vmatpush1.msra.mxu0 0.0
    %626 = vmatprep.subr.mxu0 0.0
    %627 = vmatpush1.msra.mxu0 0.0
    %628 = vmatprep.subr.mxu0 0.0
    %629 = vmatpush1.msra.mxu0 0.0
    %630 = vmatprep.subr.mxu0 0.0
    %631 = vmatpush1.msra.mxu0 0.0
    %632 = vmatprep.subr.mxu0 0.0
    %633 = vmatpush1.msra.mxu0 0.0
    %634 = vmatprep.subr.mxu0 0.0
    %635 = vmatpush1.msra.mxu0 0.0
    %636 = vmatprep.subr.mxu0 0.0
    %637 = vmatpush1.msra.mxu0 0.0
    %638 = vmatprep.subr.mxu0 0.0
    %639 = vmatpush1.msra.mxu0 0.0
    %640 = vmatprep.subr.mxu0 0.0
    %641 = vmatpush1.msra.mxu0 0.0
    %642 = vmatprep.subr.mxu0 0.0
    %643 = vmatpush1.msra.mxu0 0.0
    %644 = vmatprep.subr.mxu0 0.0
    %645 = vmatpush1.msra.mxu0 0.0
    %646 = vmatprep.subr.mxu0 0.0
    %647 = vmatpush1.msra.mxu0 0.0
    %648 = vmatprep.subr.mxu0 0.0
    %649 = vmatpush1.msra.mxu0 0.0
    %650 = vmatprep.subr.mxu0 0.0
    %651 = vmatpush1.msra.mxu0 0.0
    %652 = vmatprep.subr.mxu0 0.0
    %653 = vmatpush1.msra.mxu0 0.0
    %654 = vmatprep.subr.mxu0 0.0
    %655 = vmatpush1.msra.mxu0 0.0
    %656 = vmatprep.subr.mxu0 0.0
    %657 = vmatpush1.msra.mxu0 0.0
    %658 = vmatprep.subr.mxu0 0.0
    %659 = vmatpush1.msra.mxu0 0.0
    %660 = vmatprep.subr.mxu0 0.0
    %661 = vmatpush1.msra.mxu0 0.0
    %662 = vmatprep.subr.mxu0 0.0
    %663 = vmatpush1.msra.mxu0 0.0
    %664 = vmatprep.mubr.f32.mxu0 0.0
    %665 = vmatmul.mubr.f32.gmra.mrb[0].mxu0 %v595
    %v666 = vpop.f32.mrb[0].mxu0
    %v667 = vadd.f32 %v593, %v666
    %v668 = vpop.f32.mrb[0].mxu0
    %669 = vmatprep.mubr.f32.mxu0 0.0
    %670 = vmatmul.mubr.f32.gmra.mrb[0].mxu0 %v598
    %v671 = vpop.f32.mrb[0].mxu0
    %v672 = vadd.f32 %v593, %v671
    %v673 = vpop.f32.mrb[0].mxu0
    %674 = vdwg.mxu0
    %v675 = vadd.f32 %v36, %v667
    %v676 = vadd.f32 %v37, %v672
    %v677 = vsel %vm39, %v675, 0.0
    %678 = vadd.xlane.f32.xlu0 %v677
    %v679 = vpop.xlane.xlu0 %678
    %v680 = vsel %vm39, %v676, 0.0
    %681 = vadd.xlane.f32.xlu0 %v680
    %v682 = vpop.xlane.xlu0 %681
    %v683 = vmul.f32 %v679, %v46
    %v684 = vmul.f32 %v682, %v46
    %v685 = vsub.f32 %v675, %v683
    %v686 = vsub.f32 %v676, %v684
    %v687 = vmul.f32 %v685, %v685
    %v688 = vmul.f32 %v686, %v686
    %v689 = vsel %vm39, %v687, 0.0
    %690 = vadd.xlane.f32.xlu0 %v689
    %v691 = vpop.xlane.xlu0 %690
    %v692 = vsel %vm39, %v688, 0.0
    %693 = vadd.xlane.f32.xlu0 %v692
    %v694 = vpop.xlane.xlu0 %693
    %v695 = vmul.f32 %v691, %v46
    %v696 = vmul.f32 %v694, %v46
    %v697 = vadd.f32 %v695, 1e-05
    %v698 = vadd.f32 %v696, 1e-05
    %v699 = vrsqrt.pop %v697
    %v700 = vrsqrt.pop %v698
    %v701 = vmul.f32 %v685, %v699
    %v702 = vmul.f32 %v686, %v700
    %v703 = vlaneseq
    %v704 = vshrl.u32 %v703, 7
    %v705 = vsub.s32 2, %v704
    %v706 = vrot.slane %v38, %v705
    %v707 = vmul.f32 %v701, %v706
    %v708 = vmul.f32 %v702, %v706
    %v709 = vlaneseq
    %v710 = vshrl.u32 %v709, 7
    %v711 = vsub.s32 3, %v710
    %v712 = vrot.slane %v38, %v711
    %v713 = vadd.f32 %v707, %v712
    %v714 = vadd.f32 %v708, %v712
    %v715 = vld [vmem:[%s3] sm:$0xff]
    %v716 = vld [vmem:[%s3 + $0x8] sm:$0xff]
    %v717 = vld [vmem:[%s3 + $0x10] sm:$0xff]
    %v718 = vld [vmem:[%s3 + $0x18] sm:$0xff]
    %v719 = vld [vmem:[%s6] sm:$0x1]
    %v721 = vlaneseq
    %v722 = vshrl.u32 %v721, 7
    %v723 = vsub.s32 0, %v722
    %v724 = vrot.slane %v719, %v723
    %v727 = vsel %vm39, %v713, 0
    %v730 = vsel %vm39, %v714, 0
    %732 = vmatprep.subr.mxu0 0.0
    %733 = vmatpush1.msra.mxu0 %v715
    %734 = vmatprep.subr.mxu0 0.0
    %735 = vmatpush1.msra.mxu0 %v716
    %736 = vmatprep.subr.mxu0 0.0
    %737 = vmatpush1.msra.mxu0 %v717
    %738 = vmatprep.subr.mxu0 0.0
    %739 = vmatpush1.msra.mxu0 %v718
    %740 = vmatprep.subr.mxu0 0.0
    %741 = vmatpush1.msra.mxu0 0.0
    %742 = vmatprep.subr.mxu0 0.0
    %743 = vmatpush1.msra.mxu0 0.0
    %744 = vmatprep.subr.mxu0 0.0
    %745 = vmatpush1.msra.mxu0 0.0
    %746 = vmatprep.subr.mxu0 0.0
    %747 = vmatpush1.msra.mxu0 0.0
    %748 = vmatprep.subr.mxu0 0.0
    %749 = vmatpush1.msra.mxu0 0.0
    %750 = vmatprep.subr.mxu0 0.0
    %751 = vmatpush1.msra.mxu0 0.0
    %752 = vmatprep.subr.mxu0 0.0
    %753 = vmatpush1.msra.mxu0 0.0
    %754 = vmatprep.subr.mxu0 0.0
    %755 = vmatpush1.msra.mxu0 0.0
    %756 = vmatprep.subr.mxu0 0.0
    %757 = vmatpush1.msra.mxu0 0.0
    %758 = vmatprep.subr.mxu0 0.0
    %759 = vmatpush1.msra.mxu0 0.0
    %760 = vmatprep.subr.mxu0 0.0
    %761 = vmatpush1.msra.mxu0 0.0
    %762 = vmatprep.subr.mxu0 0.0
    %763 = vmatpush1.msra.mxu0 0.0
    %764 = vmatprep.subr.mxu0 0.0
    %765 = vmatpush1.msra.mxu0 0.0
    %766 = vmatprep.subr.mxu0 0.0
    %767 = vmatpush1.msra.mxu0 0.0
    %768 = vmatprep.subr.mxu0 0.0
    %769 = vmatpush1.msra.mxu0 0.0
    %770 = vmatprep.subr.mxu0 0.0
    %771 = vmatpush1.msra.mxu0 0.0
    %772 = vmatprep.subr.mxu0 0.0
    %773 = vmatpush1.msra.mxu0 0.0
    %774 = vmatprep.subr.mxu0 0.0
    %775 = vmatpush1.msra.mxu0 0.0
    %776 = vmatprep.subr.mxu0 0.0
    %777 = vmatpush1.msra.mxu0 0.0
    %778 = vmatprep.subr.mxu0 0.0
    %779 = vmatpush1.msra.mxu0 0.0
    %780 = vmatprep.subr.mxu0 0.0
    %781 = vmatpush1.msra.mxu0 0.0
    %782 = vmatprep.subr.mxu0 0.0
    %783 = vmatpush1.msra.mxu0 0.0
    %784 = vmatprep.subr.mxu0 0.0
    %785 = vmatpush1.msra.mxu0 0.0
    %786 = vmatprep.subr.mxu0 0.0
    %787 = vmatpush1.msra.mxu0 0.0
    %788 = vmatprep.subr.mxu0 0.0
    %789 = vmatpush1.msra.mxu0 0.0
    %790 = vmatprep.subr.mxu0 0.0
    %791 = vmatpush1.msra.mxu0 0.0
    %792 = vmatprep.subr.mxu0 0.0
    %793 = vmatpush1.msra.mxu0 0.0
    %794 = vmatprep.subr.mxu0 0.0
    %795 = vmatpush1.msra.mxu0 0.0
    %796 = vmatprep.mubr.f32.mxu0 0.0
    %797 = vmatmul.mubr.f32.gmra.mrb[0].mxu0 %v727
    %v798 = vpop.f32.mrb[0].mxu0
    %v799 = vadd.f32 %v724, %v798
    %v800 = vpop.f32.mrb[0].mxu0
    %801 = vmatprep.mubr.f32.mxu0 0.0
    %802 = vmatmul.mubr.f32.gmra.mrb[0].mxu0 %v730
    %v803 = vpop.f32.mrb[0].mxu0
    %v804 = vadd.f32 %v724, %v803
    %v805 = vpop.f32.mrb[0].mxu0
    %806 = vdwg.mxu0
    %v807 = vmax.f32 %v799, 0.0
    %v808 = vmax.f32 %v804, 0.0
    %v809 = vld [vmem:[%s4] sm:$0xff]
    %v810 = vld [vmem:[%s4 + $0x8] sm:$0xff]
    %v811 = vld [vmem:[%s4 + $0x10] sm:$0xff]
    %v812 = vld [vmem:[%s4 + $0x18] sm:$0xff]
    %v813 = vld [vmem:[%s4 + $0x20] sm:$0xff]
    %v814 = vld [vmem:[%s4 + $0x28] sm:$0xff]
    %v815 = vld [vmem:[%s4 + $0x30] sm:$0xff]
    %v816 = vld [vmem:[%s4 + $0x38] sm:$0xff]
    %v817 = vld [vmem:[%s4 + $0x40] sm:$0xff]
    %v818 = vld [vmem:[%s4 + $0x48] sm:$0xff]
    %v819 = vld [vmem:[%s4 + $0x50] sm:$0xff]
    %v820 = vld [vmem:[%s4 + $0x58] sm:$0xff]
    %v821 = vld [vmem:[%s4 + $0x60] sm:$0xff]
    %v822 = vld [vmem:[%s4 + $0x68] sm:$0xff]
    %v823 = vld [vmem:[%s4 + $0x70] sm:$0xff]
    %v824 = vld [vmem:[%s4 + $0x78] sm:$0xff]
    %v825 = vlaneseq
    %v826 = vshrl.u32 %v825, 7
    %v827 = vsub.s32 5, %v826
    %v828 = vrot.slane %v38, %v827
    %829 = vmatprep.subr.mxu0 0.0
    %830 = vmatpush1.msra.mxu0 %v809
    %831 = vmatprep.subr.mxu0 0.0
    %832 = vmatpush1.msra.mxu0 %v810
    %833 = vmatprep.subr.mxu0 0.0
    %834 = vmatpush1.msra.mxu0 %v811
    %835 = vmatprep.subr.mxu0 0.0
    %836 = vmatpush1.msra.mxu0 %v812
    %837 = vmatprep.subr.mxu0 0.0
    %838 = vmatpush1.msra.mxu0 %v813
    %839 = vmatprep.subr.mxu0 0.0
    %840 = vmatpush1.msra.mxu0 %v814
    %841 = vmatprep.subr.mxu0 0.0
    %842 = vmatpush1.msra.mxu0 %v815
    %843 = vmatprep.subr.mxu0 0.0
    %844 = vmatpush1.msra.mxu0 %v816
    %845 = vmatprep.subr.mxu0 0.0
    %846 = vmatpush1.msra.mxu0 %v817
    %847 = vmatprep.subr.mxu0 0.0
    %848 = vmatpush1.msra.mxu0 %v818
    %849 = vmatprep.subr.mxu0 0.0
    %850 = vmatpush1.msra.mxu0 %v819
    %851 = vmatprep.subr.mxu0 0.0
    %852 = vmatpush1.msra.mxu0 %v820
    %853 = vmatprep.subr.mxu0 0.0
    %854 = vmatpush1.msra.mxu0 %v821
    %855 = vmatprep.subr.mxu0 0.0
    %856 = vmatpush1.msra.mxu0 %v822
    %857 = vmatprep.subr.mxu0 0.0
    %858 = vmatpush1.msra.mxu0 %v823
    %859 = vmatprep.subr.mxu0 0.0
    %860 = vmatpush1.msra.mxu0 %v824
    %861 = vmatprep.subr.mxu0 0.0
    %862 = vmatpush1.msra.mxu0 0.0
    %863 = vmatprep.subr.mxu0 0.0
    %864 = vmatpush1.msra.mxu0 0.0
    %865 = vmatprep.subr.mxu0 0.0
    %866 = vmatpush1.msra.mxu0 0.0
    %867 = vmatprep.subr.mxu0 0.0
    %868 = vmatpush1.msra.mxu0 0.0
    %869 = vmatprep.subr.mxu0 0.0
    %870 = vmatpush1.msra.mxu0 0.0
    %871 = vmatprep.subr.mxu0 0.0
    %872 = vmatpush1.msra.mxu0 0.0
    %873 = vmatprep.subr.mxu0 0.0
    %874 = vmatpush1.msra.mxu0 0.0
    %875 = vmatprep.subr.mxu0 0.0
    %876 = vmatpush1.msra.mxu0 0.0
    %877 = vmatprep.subr.mxu0 0.0
    %878 = vmatpush1.msra.mxu0 0.0
    %879 = vmatprep.subr.mxu0 0.0
    %880 = vmatpush1.msra.mxu0 0.0
    %881 = vmatprep.subr.mxu0 0.0
    %882 = vmatpush1.msra.mxu0 0.0
    %883 = vmatprep.subr.mxu0 0.0
    %884 = vmatpush1.msra.mxu0 0.0
    %885 = vmatprep.subr.mxu0 0.0
    %886 = vmatpush1.msra.mxu0 0.0
    %887 = vmatprep.subr.mxu0 0.0
    %888 = vmatpush1.msra.mxu0 0.0
    %889 = vmatprep.subr.mxu0 0.0
    %890 = vmatpush1.msra.mxu0 0.0
    %891 = vmatprep.subr.mxu0 0.0
    %892 = vmatpush1.msra.mxu0 0.0
    %893 = vmatprep.mubr.f32.mxu0 0.0
    %894 = vmatmul.mubr.f32.gmra.mrb[0].mxu0 %v807
    %v895 = vpop.f32.mrb[0].mxu0
    %v896 = vadd.f32 %v828, %v895
    %v897 = vpop.f32.mrb[0].mxu0
    %898 = vmatprep.mubr.f32.mxu0 0.0
    %899 = vmatmul.mubr.f32.gmra.mrb[0].mxu0 %v808
    %v900 = vpop.f32.mrb[0].mxu0
    %v901 = vadd.f32 %v828, %v900
    %v902 = vpop.f32.mrb[0].mxu0
    %903 = vdwg.mxu0
    %v904 = vadd.f32 %v675, %v896
    %v905 = vadd.f32 %v676, %v901
    %906 = vst.msk [vmem:[#allocation2] sm:$0xff] %vm39, %v904
    %907 = vst.msk [vmem:[#allocation2 + $0x8] sm:$0xff] %vm39, %v905
    // Predicated region
    $region42: #{tpu_custom_call.1} parent=1 // pred_check
      _
    $region43: #{tpu_custom_call.1} parent=1 // pred_check_branch
      %909 = sbr.rel (0) target = $region45
    $region44: #{tpu_custom_call.1} parent=1 // pred_region
      %s911 = ssub.s32 256, 256
      %912 = vsyncadd [#allocation3], %s911
      %s913 = sshll.u32 [#allocation2], 4
      %s914 = int_to_ptr.vmem [resolvable:$true] %s913
      %919 = dma.vmem_to_hbm [thread:$0]  %s914, 256, %s10, [#allocation3], 128, 128, 8
    $region45: #{tpu_custom_call.1} parent=1 // pred_fallthru
      _
    // Predicated region
    $region46: #{tpu_custom_call.1} parent=1 // pred_check
      _
    $region47: #{tpu_custom_call.1} parent=1 // pred_check_branch
      %921 = sbr.rel (0) target = $region49
    $region48: #{tpu_custom_call.1} parent=1 // pred_region
      %922 = dma.done [#allocation3], 256
    $region49: #{tpu_custom_call.1} parent=1 // pred_fallthru
      _
    %923 = vsyncpa [#allocation3], 1

</llo_original>
